<compile_context>
chip_gen: v5e
topology: v5e:2x2
jax: 0.10.0
libtpu: 0.0.40
codegen_flags: <defaults>
</compile_context>

<pallas_src>
import functools

import numpy as np
import jax
import jax.numpy as jnp
from jax.experimental import pallas as pl
from jax.experimental.pallas import tpu as pltpu


def _round_up(x: int, m: int) -> int:
    return ((x + m - 1) // m) * m


def _gram_kernel(*refs, shared, apply_w, compute_dtype):
    """One (Rl, tt) x (tt, Rr) MXU matmul per time tile, accumulated into the
    resident f32 output block.

    refs (in order): [wt_ref (1, tt) f32]   if apply_w   (window counts / tail mask)
                     xl_ref  (Rl, tt)
                     [xr_ref (Rr, tt)]      if not shared
                     o_ref   (Rl, Rr) f32   resident across the time grid axis
    """
    refs = list(refs)
    wt_ref = refs.pop(0) if apply_w else None
    xl_ref = refs.pop(0)
    xr_ref = xl_ref if shared else refs.pop(0)
    o_ref = refs.pop(0)

    @pl.when(pl.program_id(2) == 0)
    def _init():
        o_ref[...] = jnp.zeros_like(o_ref)

    x = xl_ref[...]
    if x.dtype != compute_dtype:
        x = x.astype(compute_dtype)
    if shared:
        y = x
    else:
        y = xr_ref[...]
        if y.dtype != compute_dtype:
            y = y.astype(compute_dtype)

    if apply_w:
        wf = wt_ref[...]                       # (1, tt) f32 counts (0 outside window/T)
        keep = wf > 0.0
        w = wf.astype(compute_dtype)
        a = jnp.where(keep, x * w, 0)          # weights applied to ONE side only
        b = jnp.where(keep, y, 0)              # NaN-safe zeroing of masked columns
    else:
        a, b = x, y

    # (Rl, tt) . (Rr, tt)^T -> (Rl, Rr); default precision, f32 accumulation.
    o_ref[...] += jax.lax.dot_general(
        a, b, (((1,), (1,)), ((), ())),
        preferred_element_type=jnp.float32)


def _pick_time_tile(t_len: int, per_t_bytes: int, budget_bytes: int) -> int:
    """Largest 256-aligned (>=128) time tile whose double-buffered input slabs fit
    under `budget_bytes`.  Remainder tiles are handled by in-kernel masking."""
    cap = max(budget_bytes // max(per_t_bytes, 1), 128)
    if t_len <= cap:
        return _round_up(t_len, 128)
    if cap >= 256:
        return (cap // 256) * 256              # MXU contraction granule on v6e/v7x
    return 128


def correlation(sxl, idx_l, idx_r, sxr=None, multivariate=True, window=None,
                time_tile=None):
    """Pallas equivalent of Correlation.forward (ave = TimeAverage(window)).

    sxl: (B, Nl, jl, Al, T);  sxr: (B, Nr, jr, Ar, T) or None (auto-correlation).
    idx_l, idx_r: (K,) int scale indices (the module's idx_l/idx_r buffers,
    i.e. already shifted for rl/rr == 2).
    Returns (B, C, K, 1) with C = Nl*Nr if multivariate else Nl.
    """
    shared = sxr is None
    xl_src = sxl
    xr_src = sxl if shared else sxr

    if (jnp.issubdtype(xl_src.dtype, jnp.complexfloating)
            or jnp.issubdtype(xr_src.dtype, jnp.complexfloating)):
        # TODO(synk): complex inputs (xr.conj()) need a real/imag decomposition.
        raise NotImplementedError("complex inputs are not supported")

    B, Nl, jl, Al, T = xl_src.shape
    Br, Nr, jr, Ar, Tr = xr_src.shape
    assert (Br, Tr) == (B, T), "sxl / sxr batch and time sizes must match"

    idx_l = jnp.asarray(idx_l, jnp.int32)
    idx_r = jnp.asarray(idx_r, jnp.int32)
    K = int(idx_l.shape[0])
    assert idx_r.shape == (K,)

    # Host-side bounds check (torch.index_select raises on OOB scale indices;
    # a silent clamp would produce wrong numbers).
    try:
        il_h, ir_h = np.asarray(idx_l), np.asarray(idx_r)
    except Exception:                           # traced indices: skip static check
        il_h = ir_h = None
    if il_h is not None and K > 0:
        assert il_h.min() >= 0 and il_h.max() < jl, "idx_l out of range"
        assert ir_h.min() >= 0 and ir_h.max() < jr, "idx_r out of range"

    if not multivariate:
        assert Nr >= Nl, "univariate mode indexes the first Nl channels of sxr"

    Rl, Rc = Nl * jl, Nr * jr                   # Gram block rows / cols

    cdt = jnp.result_type(xl_src.dtype, xr_src.dtype)
    if not jnp.issubdtype(cdt, jnp.floating):
        cdt = jnp.float32                       # torch would refuse an integer mean
    out_dtype = cdt

    # Free (adjacent-dim) reshapes only -- no HBM copies before the kernel.
    xl_m = xl_src.reshape(B, Rl, Al * T)
    xr_m = xl_m if shared else xr_src.reshape(B, Rc, Ar * T)

    # --- generation-aware time tiling + VMEM budget --------------------------
    il_sz, ir_sz = xl_m.dtype.itemsize, xr_m.dtype.itemsize
    sub_l, sub_r = max(8, 32 // il_sz), max(8, 32 // ir_sz)
    per_t_bytes = 2 * _round_up(Rl, sub_l) * il_sz          # double-buffered inputs
    if not shared:
        per_t_bytes += 2 * _round_up(Rc, sub_r) * ir_sz

    try:
        vmem_cap = int(pltpu.get_tpu_info().vmem_capacity_bytes)
    except Exception:
        vmem_cap = 64 * 1024 * 1024                          # v7x-safe fallback
    # 128 MiB parts (v5e/v6e) can afford half of VMEM for the input pipeline;
    # stay conservative on 64 MiB v7x.
    input_budget = vmem_cap // 2 if vmem_cap >= (96 << 20) else vmem_cap // 4

    if time_tile is None:
        tt = _pick_time_tile(T, per_t_bytes, input_budget)
        if B == 1 and T > 128:
            # keep >= 2 time tiles so the 2-way split can feed both v7x cores
            tt = min(tt, max(_round_up(pl.cdiv(T, 2), 128), 128))
    else:
        tt = int(time_tile)
        assert tt % 128 == 0, "time_tile must be a multiple of 128"
    n_t = pl.cdiv(T, tt)

    # v7x has 2 TensorCores: if the batch alone cannot feed both, split the time
    # reduction into 2 parallel partial Gram sums (added back in the wrapper).
    S = 2 if (B == 1 and n_t >= 2 and n_t % 2 == 0) else 1
    nt_per = n_t // S
    t_pad = n_t * tt

    # TimeAverage window -> per-time count vector (supports repeated indices);
    # also doubles as the tail mask when tt does not divide T.
    if window is not None:
        w_idx = jnp.asarray(window, jnp.int32)
        divisor = int(w_idx.shape[0])
        assert divisor > 0
        wt = jnp.zeros((t_pad,), jnp.float32).at[w_idx].add(1.0)
        apply_w = True
    else:
        divisor = T
        apply_w = (t_pad != T)
        wt = jnp.zeros((t_pad,), jnp.float32).at[:T].set(1.0) if apply_w else None
    # TODO(synk): for tiny sparse windows a gathered/strided DMA would read less HBM.
    if apply_w:
        wt = wt.reshape(1, t_pad)

    out_block_bytes = _round_up(Rl, 8) * _round_up(Rc, 128) * 4
    needed = per_t_bytes * tt + 2 * tt * 4 + 2 * out_block_bytes + (4 << 20)
    vmem_limit = int(min(max(needed, 32 << 20), max(vmem_cap - (8 << 20), 32 << 20)))

    # --- fused pallas call ----------------------------------------------------
    grid = (B, S, nt_per)

    in_specs = []
    operands = []
    if apply_w:
        in_specs.append(pl.BlockSpec((1, tt),
                                     lambda b, s, t: (0, s * nt_per + t)))
        operands.append(wt)
    in_specs.append(pl.BlockSpec((None, Rl, tt),
                                 lambda b, s, t: (b, 0, s * nt_per + t)))
    operands.append(xl_m)
    if not shared:
        in_specs.append(pl.BlockSpec((None, Rc, tt),
                                     lambda b, s, t: (b, 0, s * nt_per + t)))
        operands.append(xr_m)

    kernel = functools.partial(_gram_kernel, shared=shared, apply_w=apply_w,
                               compute_dtype=cdt)

    gram = pl.pallas_call(
        kernel,
        out_shape=jax.ShapeDtypeStruct((B, S, Rl, Rc), jnp.float32),
        grid_spec=pltpu.PrefetchScalarGridSpec(
            num_scalar_prefetch=0,
            grid=grid,
            in_specs=in_specs,
            out_specs=pl.BlockSpec((None, None, Rl, Rc),
                                   lambda b, s, t: (b, s, 0, 0)),
        ),
        compiler_params=pltpu.CompilerParams(
            dimension_semantics=("parallel", "parallel", "arbitrary"),
            vmem_limit_bytes=vmem_limit,
        ),
    )(*operands)

    # --- tiny post-processing on the (B, Rl, Rc) Gram block -------------------
    gram = gram.sum(axis=1) * jnp.float32(1.0 / divisor)     # join splits + mean
    g = gram.reshape(B, Nl, jl, Nr, jr)
    g = jnp.transpose(g, (0, 1, 3, 2, 4)).reshape(B, Nl, Nr, jl * jr)
    sel = jnp.take(g, idx_l * jr + idx_r, axis=-1)           # (B, Nl, Nr, K)
    if multivariate:
        # channel order matches itertools.product(range(Nl), range(Nr))
        y = sel.reshape(B, Nl * Nr, K, 1)
    else:
        d = jnp.arange(Nl)
        y = sel[:, d, d, :].reshape(B, Nl, K, 1)
    return y.astype(out_dtype)


def _reference(sxl, sxr, idx_l, idx_r, multivariate, window=None):
    xl = jnp.take(sxl[:, :, :, 0, :], jnp.asarray(idx_l), axis=2)
    xr = jnp.take(sxr[:, :, :, 0, :], jnp.asarray(idx_r), axis=2)
    Nl, Nr = sxl.shape[1], sxr.shape[1]
    if multivariate:
        nl = jnp.repeat(jnp.arange(Nl), Nr)
        nr = jnp.tile(jnp.arange(Nr), Nl)
    else:
        nl = nr = jnp.arange(Nl)
    xl = jnp.take(xl, nl, axis=1)
    xr = jnp.take(xr, nr, axis=1)
    prod = xl * xr                                           # real inputs: conj is identity
    if window is not None:
        prod = jnp.take(prod, jnp.asarray(window, jnp.int32), axis=-1)
    return jnp.mean(prod, axis=-1, keepdims=True)


if __name__ == "__main__":
    key = jax.random.PRNGKey(0)
    B, N, J, A, T = 2, 3, 4, 2, 512
    k1, k2 = jax.random.split(key)
    sxl = jax.random.normal(k1, (B, N, J, A, T), dtype=jnp.float32)
    sxr = jax.random.normal(k2, (B, N, J, A, T), dtype=jnp.float32)

    # Diagonal-model scale pairs (j_l <= j_r), standing in for the module's
    # ScaleIndexer / create_scale_description output (host-side index glue).
    pairs = [(a, b) for a in range(J) for b in range(a, J)]
    idx_l = jnp.asarray([p[0] for p in pairs], jnp.int32)
    idx_r = jnp.asarray([p[1] for p in pairs], jnp.int32)
    K = len(pairs)

    # default-precision (single bf16-pass) MXU matmul vs an exact f32 reference
    ATOL, RTOL = 2e-3, 2e-3

    # 1) auto-correlation (sxr=None), multivariate channel pairs.
    y1 = correlation(sxl, idx_l, idx_r)
    jax.block_until_ready(y1)
    r1 = _reference(sxl, sxl, idx_l, idx_r, multivariate=True)
    assert y1.shape == (B, N * N, K, 1)
    assert jnp.allclose(y1, r1, atol=ATOL, rtol=RTOL)

    # 2) cross-correlation, univariate (diagonal channels), forced time tiling
    #    (exercises the multi-step resident-accumulator path).
    y2 = correlation(sxl, idx_l, idx_r, sxr=sxr, multivariate=False, time_tile=128)
    jax.block_until_ready(y2)
    r2 = _reference(sxl, sxr, idx_l, idx_r, multivariate=False)
    assert y2.shape == (B, N, K, 1)
    assert jnp.allclose(y2, r2, atol=ATOL, rtol=RTOL)

    # 3) multivariate cross-correlation with a TimeAverage window (mask-and-sum).
    window = list(range(0, T, 2))
    y3 = correlation(sxl, idx_l, idx_r, sxr=sxr, multivariate=True, window=window)
    jax.block_until_ready(y3)
    r3 = _reference(sxl, sxr, idx_l, idx_r, multivariate=True, window=window)
    assert y3.shape == (B, N * N, K, 1)
    assert jnp.allclose(y3, r3, atol=ATOL, rtol=RTOL)

    # 4) time tile that does not divide T (exercises in-kernel tail masking).
    y4 = correlation(sxl, idx_l, idx_r, sxr=sxr, multivariate=True, time_tile=384)
    jax.block_until_ready(y4)
    r4 = _reference(sxl, sxr, idx_l, idx_r, multivariate=True)
    assert y4.shape == (B, N * N, K, 1)
    assert jnp.allclose(y4, r4, atol=ATOL, rtol=RTOL)

    # 5) B == 1 (exercises the 2-way parallel time split for v7x megacore).
    y5 = correlation(sxl[:1], idx_l, idx_r, sxr=sxr[:1], multivariate=True,
                     time_tile=128)
    jax.block_until_ready(y5)
    r5 = _reference(sxl[:1], sxr[:1], idx_l, idx_r, multivariate=True)
    assert y5.shape == (1, N * N, K, 1)
    assert jnp.allclose(y5, r5, atol=ATOL, rtol=RTOL)

    print("KERNEL_OK")
</pallas_src>

<mosaic_0001>
module attributes {stable_mosaic.version = 11 : i64} {
  func.func @_gram_kernel(%arg0: i32, %arg1: i32, %arg2: i32, %arg3: memref<1x12x512xf32, #tpu.memory_space<vmem>>, %arg4: memref<1x1x12x12xf32, #tpu.memory_space<vmem>>) attributes {dimension_semantics = [#tpu.dimension_semantics<parallel>, #tpu.dimension_semantics<parallel>, #tpu.dimension_semantics<arbitrary>], iteration_bounds = array<i64: 2, 1, 1>, scalar_prefetch = 0 : i64, scratch_operands = 0 : i64, tpu.core_type = #tpu.core_type<tc>, window_params = [{transform_indices = @transform_0, window_bounds = array<i64: 1, 12, 512>}, {transform_indices = @transform_1, window_bounds = array<i64: 1, 1, 12, 12>}]} {
    %c0_i32 = arith.constant 0 : i32
    %0 = arith.cmpi eq, %arg2, %c0_i32 : i32
    %1 = arith.extui %0 : i1 to i32
    %c0_i32_0 = arith.constant 0 : i32
    %2 = arith.cmpi ne, %1, %c0_i32_0 : i32
    scf.if %2 {
      %cst_11 = arith.constant 0.000000e+00 : f32
      %12 = vector.broadcast %cst_11 : f32 to vector<12x12xf32>
      %c0_12 = arith.constant 0 : index
      %c0_13 = arith.constant 0 : index
      %c0_14 = arith.constant 0 : index
      %c0_15 = arith.constant 0 : index
      %13 = vector.load %arg4[%c0_12, %c0_13, %c0_14, %c0_15] : memref<1x1x12x12xf32, #tpu.memory_space<vmem>>, vector<1x1x12x12xf32>
      %14 = vector.shape_cast %13 : vector<1x1x12x12xf32> to vector<12x12xf32>
      %15 = vector.shape_cast %12 : vector<12x12xf32> to vector<1x1x12x12xf32>
      tpu.vector_store %arg4[%c0_12, %c0_13, %c0_14, %c0_15], %15 {strides = array<i32>} : memref<1x1x12x12xf32, #tpu.memory_space<vmem>>, vector<1x1x12x12xf32>,
    } else {
    }
    %c0 = arith.constant 0 : index
    %c0_1 = arith.constant 0 : index
    %c0_2 = arith.constant 0 : index
    %3 = vector.load %arg3[%c0, %c0_1, %c0_2] : memref<1x12x512xf32, #tpu.memory_space<vmem>>, vector<1x12x512xf32>
    %4 = vector.shape_cast %3 : vector<1x12x512xf32> to vector<12x512xf32>
    %c0_3 = arith.constant 0 : index
    %c0_4 = arith.constant 0 : index
    %c0_5 = arith.constant 0 : index
    %c0_6 = arith.constant 0 : index
    %5 = vector.load %arg4[%c0_3, %c0_4, %c0_5, %c0_6] : memref<1x1x12x12xf32, #tpu.memory_space<vmem>>, vector<1x1x12x12xf32>
    %6 = vector.shape_cast %5 : vector<1x1x12x12xf32> to vector<12x12xf32>
    %cst = arith.constant dense<0.000000e+00> : vector<12x12xf32>
    %7 = tpu.matmul %4, %4, %cst {dimension_numbers = #tpu.dot_dimension_numbers<[1], [1], [0], [0], [0, 0, 1, 0], [], []>} : vector<12x512xf32>, vector<12x512xf32>, vector<12x12xf32> -> vector<12x12xf32>
    %8 = arith.addf %6, %7 : vector<12x12xf32>
    %c0_7 = arith.constant 0 : index
    %c0_8 = arith.constant 0 : index
    %c0_9 = arith.constant 0 : index
    %c0_10 = arith.constant 0 : index
    %9 = vector.load %arg4[%c0_7, %c0_8, %c0_9, %c0_10] : memref<1x1x12x12xf32, #tpu.memory_space<vmem>>, vector<1x1x12x12xf32>
    %10 = vector.shape_cast %9 : vector<1x1x12x12xf32> to vector<12x12xf32>
    %11 = vector.shape_cast %8 : vector<12x12xf32> to vector<1x1x12x12xf32>
    tpu.vector_store %arg4[%c0_7, %c0_8, %c0_9, %c0_10], %11 {strides = array<i32>} : memref<1x1x12x12xf32, #tpu.memory_space<vmem>>, vector<1x1x12x12xf32>,
    return
  }
  func.func @transform_0(%arg0: i32, %arg1: i32, %arg2: i32) -> (i32, i32, i32) {
    %c1_i32 = arith.constant 1 : i32
    %0 = arith.muli %arg1, %c1_i32 : i32
    %1 = arith.addi %0, %arg2 : i32
    %c0_i32 = arith.constant 0 : i32
    %c0_i32_0 = arith.constant 0 : i32
    return %arg0, %c0_i32, %1 : i32, i32, i32
  }
  func.func @transform_1(%arg0: i32, %arg1: i32, %arg2: i32) -> (i32, i32, i32, i32) {
    %c0_i32 = arith.constant 0 : i32
    %c0_i32_0 = arith.constant 0 : i32
    %c0_i32_1 = arith.constant 0 : i32
    return %arg0, %arg1, %c0_i32, %c0_i32_0 : i32, i32, i32, i32
  }
}

</mosaic_0001>

<llo_original>
// kernel: tpu_custom_call.1
$region0: #{tpu_custom_call.1}
  #allocation0 [shape = 'u32[]', space=smem, size = 0x4, offset = 0x4, fixed_abs, tag = 'smem constant byte address 0x4 - core index']
  #allocation1 [shape = 'u32[72,128]{1,0:T(1,128)}', space=vmem, size = 0x9000, scoped, tag = 'internal scratch']
  %s0 = inlined_call_operand.vmem [shape: f32[2,12,1024], index: 0, kind: input, shape index: {}]
  %s1 = inlined_call_operand.vmem [shape: f32[2,1,12,12], index: 1, kind: output, shape index: {}]
  %s2 = sld [smem:[#allocation0]]
  $region64: #{tpu_custom_call.1} parent=0
    _
  %s4 = ssub.s32 1, %s2
  %s5 = scalar_select 0, %s4, %s2
  $region1: #{tpu_custom_call.1} parent=0
    #allocation2 [shape = 'u8[65536]{0}', space=vmem, size = 0x10000, scoped, tag = 'input window, operand 0']
    loop: start=0, step=1, limit=4
    $region2: #{tpu_custom_call.1} parent=1 // loop_pre_header
      _
    $region3: #{tpu_custom_call.1} parent=1 // loop_header
      %s7 = sphi 0, %s11
      %p8 = scmp.ge.s32.totalorder %s7, 4
      %s14 = sphi 0, %s33
      %s15 = sphi 0, %s29
      %s16 = sphi 0, %s25
      %s17 = sphi 0, %s14
      %s18 = sphi 0, %s15
      %s19 = sphi 0, %s16
      %s20 = sphi 0, %s17
      %s21 = sphi 0, %s18
      %s22 = sphi 0, %s19
      %s40 = sphi 0, %s42
      %s43 = sphi 0, %s40
      %s44 = sphi 0, %s43
      %s60 = sphi 0, %s44
      %s68 = sphi 0, %s70
      %s71 = sphi 0, %s68
      %s72 = sphi 0, %s71
      %s88 = sphi 0, %s72
    $region4: #{tpu_custom_call.1} parent=1 // loop_header_branch
      %10 = sbr.rel (%p8) target = $region8
    $region5: #{tpu_custom_call.1} parent=1 // loop_body
      %s12 = ssub.s32 %s7, 1
      %s13 = ssub.s32 %s7, 2
      %s23 = sadd.s32 1, %s16
      %p24 = scmp.ge.s32.totalorder %s23, 1
      %s25 = scalar_select %p24, 0, %s23
      %s26 = sadd.s32 1, %s15
      %s27 = scalar_select %p24, %s26, %s15
      %p28 = scmp.ge.s32.totalorder %s27, 1
      %s29 = scalar_select %p28, 0, %s27
      %s30 = sadd.s32 1, %s14
      %s31 = scalar_select %p28, %s30, %s14
      %p32 = scmp.ge.s32.totalorder %s31, 2
      %s33 = scalar_select %p32, 0, %s31
      %s34 = sadd.s32 %s15, %s16
      %s35 = sadd.s32 %s29, %s25
      %s36 = ssub.s32 %s14, %s33
      %s37 = ssub.s32 %s34, %s35
      %s38 = sor.u32 %s36, %s37
      %p39 = scmp.eq.s32.totalorder %s38, 0
      %s41 = sadd.s32 %s40, 1
      %s42 = scalar_select %p39, %s40, %s41
      %p45 = pneg %p39
      %p46 = scmp.eq.s32.totalorder %s7, 1
      %p47 = por %p45, %p46
      %p48 = scmp.ne.s32.totalorder %s40, %s43
      %p49 = scmp.eq.s32.totalorder %s7, 0
      %p50 = por %p48, %p49
      %p51 = scmp.ne.s32.totalorder %s40, %s43
      %p52 = scmp.eq.s32.totalorder %s12, 1
      %p53 = por %p51, %p52
      %p54 = scmp.ne.s32.totalorder %s43, %s44
      %p55 = scmp.eq.s32.totalorder %s12, 0
      %p56 = por %p54, %p55
      %p57 = scmp.ne.s32.totalorder %s43, %s44
      %p58 = scmp.eq.s32.totalorder %s13, 1
      %p59 = por %p57, %p58
      %p61 = scmp.ne.s32.totalorder %s44, %s60
      %p62 = scmp.eq.s32.totalorder %s13, 0
      %p63 = por %p61, %p62
      %s64 = ssub.s32 %s14, %s33
      %s65 = ssub.s32 %s15, %s29
      %s66 = sor.u32 %s64, %s65
      %p67 = scmp.eq.s32.totalorder %s66, 0
      %s69 = sadd.s32 %s68, 1
      %s70 = scalar_select %p67, %s68, %s69
      %p73 = pneg %p67
      %p74 = scmp.eq.s32.totalorder %s7, 1
      %p75 = por %p73, %p74
      %p76 = scmp.ne.s32.totalorder %s68, %s71
      %p77 = scmp.eq.s32.totalorder %s7, 0
      %p78 = por %p76, %p77
      %p79 = scmp.ne.s32.totalorder %s68, %s71
      %p80 = scmp.eq.s32.totalorder %s12, 1
      %p81 = por %p79, %p80
      %p82 = scmp.ne.s32.totalorder %s71, %s72
      %p83 = scmp.eq.s32.totalorder %s12, 0
      %p84 = por %p82, %p83
      %p85 = scmp.ne.s32.totalorder %s71, %s72
      %p86 = scmp.eq.s32.totalorder %s13, 1
      %p87 = por %p85, %p86
      %p89 = scmp.ne.s32.totalorder %s72, %s88
      %p90 = scmp.eq.s32.totalorder %s13, 0
      %p91 = por %p89, %p90
      %p92 = scmp.le.s32.totalorder 1, %s7
      %p93 = scmp.lt.s32.totalorder %s7, 3
      %p94 = pnand %p92, %p93
      %p95 = pneg %p94
      // Predicated region
      $region9: #{tpu_custom_call.1} parent=5 // pred_check
        _
      $region10: #{tpu_custom_call.1} parent=5 // pred_check_branch
        %97 = sbr.rel (%p94) target = $region12
      $region11: #{tpu_custom_call.1} parent=5 // pred_region
        %s98 = ssub.s32 %s7, 1
      $region12: #{tpu_custom_call.1} parent=5 // pred_fallthru
        _
      %p99 = scmp.lt.s32.totalorder %s7, 2
      // Predicated region
      $region13: #{tpu_custom_call.1} parent=5 // pred_check
        %p100 = pneg %p99
      $region14: #{tpu_custom_call.1} parent=5 // pred_check_branch
        %102 = sbr.rel (%p100) target = $region16
      $region15: #{tpu_custom_call.1} parent=5 // pred_region
        // Predicated region
        $region17: #{tpu_custom_call.1} parent=15 // pred_check
          %p103 = pneg %p50
        $region18: #{tpu_custom_call.1} parent=15 // pred_check_branch
          %105 = sbr.rel (%p103) target = $region20
        $region19: #{tpu_custom_call.1} parent=15 // pred_region
          %s106 = sand.u32 %s40, 1
          %s107 = sand.u32 %s40, 1
          %s108 = smul.addr %s107, 64
          %s109 = scalar_lea.vmem [#allocation2], %s108
          %s110 = sadd.s32 %s15, %s16
          %s111 = smul.u32 4, %s110
          %s112 = smul.addr %s14, 16
          %s113 = sadd.s32 %s111, %s112
          %s114 = smul.addr %s113, 8
          %s115 = scalar_lea.vmem %s0, %s114
          // Predicated region
          $region21: #{tpu_custom_call.1} parent=19 // pred_check
            _
          $region22: #{tpu_custom_call.1} parent=19 // pred_check_branch
            %117 = sbr.rel (0) target = $region24
          $region23: #{tpu_custom_call.1} parent=19 // pred_region
            // Predicated region
            $region25: #{tpu_custom_call.1} parent=23 // pred_check
              _
            $region26: #{tpu_custom_call.1} parent=23 // pred_check_branch
              %119 = sbr.rel (0) target = $region28
            $region27: #{tpu_custom_call.1} parent=23 // pred_region
              loop: start=0, step=1, limit=1
              $region29: #{tpu_custom_call.1} parent=27 // loop_pre_header
                _
              $region30: #{tpu_custom_call.1} parent=27 // loop_header
                %s121 = sphi 0, %s125
                %p122 = scmp.ge.s32.totalorder %s121, 1
                %s126 = sphi %s115, %s115
                %s127 = sphi %s109, %s109
              $region31: #{tpu_custom_call.1} parent=27 // loop_header_branch
                %124 = sbr.rel (%p122) target = $region35
              $region32: #{tpu_custom_call.1} parent=27 // loop_body
                %v128 = vld [vmem:[%s126] sm:$0xff]
                %129 = vst [vmem:[%s127] sm:$0xff] %v128
                %v130 = vld [vmem:[%s126 + $0x8] sm:$0xff]
                %131 = vst [vmem:[%s127 + $0x8] sm:$0xff] %v130
                %v132 = vld [vmem:[%s126 + $0x10] sm:$0xff]
                %133 = vst [vmem:[%s127 + $0x10] sm:$0xff] %v132
                %v134 = vld [vmem:[%s126 + $0x18] sm:$0xff]
                %135 = vst [vmem:[%s127 + $0x18] sm:$0xff] %v134
                %v136 = vld [vmem:[%s126 + $0x40] sm:$0xff]
                %137 = vst [vmem:[%s127 + $0x20] sm:$0xff] %v136
                %v138 = vld [vmem:[%s126 + $0x48] sm:$0xff]
                %139 = vst [vmem:[%s127 + $0x28] sm:$0xff] %v138
                %v140 = vld [vmem:[%s126 + $0x50] sm:$0xff]
                %141 = vst [vmem:[%s127 + $0x30] sm:$0xff] %v140
                %v142 = vld [vmem:[%s126 + $0x58] sm:$0xff]
                %143 = vst [vmem:[%s127 + $0x38] sm:$0xff] %v142
              $region33: #{tpu_custom_call.1} parent=27 // loop_footer
                %s125 = sadd.s32 1, %s121
              $region34: #{tpu_custom_call.1} parent=27 // loop_footer_branch
                %120 = sbr.rel target = $region30
              $region35: #{tpu_custom_call.1} parent=27 // loop_exit
                _
            $region28: #{tpu_custom_call.1} parent=23 // pred_fallthru
              _
            // Predicated region
            $region36: #{tpu_custom_call.1} parent=23 // pred_check
              _
            $region37: #{tpu_custom_call.1} parent=23 // pred_check_branch
              %145 = sbr.rel target = $region39
            $region38: #{tpu_custom_call.1} parent=23 // pred_region
              _
            $region39: #{tpu_custom_call.1} parent=23 // pred_fallthru
              _
          $region24: #{tpu_custom_call.1} parent=19 // pred_fallthru
            _
          %146 = vnop
        $region20: #{tpu_custom_call.1} parent=15 // pred_fallthru
          _
      $region16: #{tpu_custom_call.1} parent=5 // pred_fallthru
        _
      %p147 = scmp.le.s32.totalorder 1, %s7
      %p148 = scmp.lt.s32.totalorder %s7, 3
      %p149 = pnand %p147, %p148
      %p150 = pneg %p149
      // Predicated region
      $region40: #{tpu_custom_call.1} parent=5 // pred_check
        _
      $region41: #{tpu_custom_call.1} parent=5 // pred_check_branch
        %152 = sbr.rel (%p149) target = $region43
      $region42: #{tpu_custom_call.1} parent=5 // pred_region
        %s153 = ssub.s32 %s7, 1
        %s154 = sand.u32 %s43, 1
        %s155 = sand.u32 %s43, 1
        %s156 = smul.addr %s155, 64
        %s157 = scalar_lea.vmem [#allocation2], %s156
        // Predicated region
        $region44: #{tpu_custom_call.1} parent=42 // pred_check
          %p158 = pneg %p56
        $region45: #{tpu_custom_call.1} parent=42 // pred_check_branch
          %160 = sbr.rel (%p158) target = $region47
        $region46: #{tpu_custom_call.1} parent=42 // pred_region
          _
        $region47: #{tpu_custom_call.1} parent=42 // pred_fallthru
          _
        %s161 = sand.u32 %s43, 1
        %s162 = sand.u32 %s43, 1
        %s163 = smul.addr %s162, 64
        %s164 = scalar_lea.vmem [#allocation2], %s163
        %p165 = pneg %p56
        %p166 = pneg %p53
        %p167 = pneg %p84
        %p168 = pneg %p81
        %p169 = scmp.lt.s32.totalorder %s17, 1
        %s170 = scalar_select %p169, %s17, 1
        %p171 = scmp.lt.s32.totalorder %s18, 0
        %s172 = scalar_select %p171, %s18, 0
        %s173 = smul.addr %s172, 2
        %s174 = smul.addr %s170, 2
        %s175 = sadd.s32 %s173, %s174
        %s176 = smul.addr %s175, 8
        %s177 = scalar_lea.vmem %s1, %s176
        %s178 = sadd.s32 %s18, %s19
        %s179 = smul.u32 4, %s178
        %p180 = scmp.lt.s32.totalorder %s17, 1
        %s181 = scalar_select %p180, %s17, 1
        %p182 = scmp.lt.s32.totalorder %s18, 0
        %s183 = scalar_select %p182, %s18, 0
        %s184 = smul.addr %s183, 2
        %s185 = smul.addr %s181, 2
        %s186 = sadd.s32 %s184, %s185
        %s187 = smul.addr %s186, 8
        %s188 = scalar_lea.vmem %s1, %s187
        %p189 = scmp.eq.s32.totalorder %s19, 0
        // Predicated region
        $region48: #{tpu_custom_call.1} parent=42 // pred_check
          %p190 = pneg %p189
        $region49: #{tpu_custom_call.1} parent=42 // pred_check_branch
          %192 = sbr.rel (%p190) target = $region51
        $region50: #{tpu_custom_call.1} parent=42 // pred_region
          %vm193 = vcmask 97280
          %194 = vst.msk [vmem:[%s188] sm:$0xff] %vm193, 0.0
          %vm195 = vcmask 93184
          %196 = vst.msk [vmem:[%s188 + $0x8] sm:$0xf] %vm195, 0.0
        $region51: #{tpu_custom_call.1} parent=42 // pred_fallthru
          _
        %v197 = vld [vmem:[%s157] sm:$0xff]
        %v198 = vld [vmem:[%s157 + $0x8] sm:$0xff]
        %v199 = vld [vmem:[%s157 + $0x10] sm:$0xff]
        %v200 = vld [vmem:[%s157 + $0x18] sm:$0xff]
        %v201 = vld [vmem:[%s157 + $0x20] sm:$0xf]
        %v202 = vld [vmem:[%s157 + $0x28] sm:$0xf]
        %v203 = vld [vmem:[%s157 + $0x30] sm:$0xf]
        %v204 = vld [vmem:[%s157 + $0x38] sm:$0xf]
        %v205 = vld [vmem:[%s188] sm:$0xff]
        %v206 = vld [vmem:[%s188 + $0x8] sm:$0xf]
        %207 = vmatpush.xpose.msra.mxu0 0.0
        %208 = vmatpush.xpose.msra.mxu0 0.0
        %209 = vmatpush.xpose.msra.mxu0 0.0
        %210 = vmatpush.xpose.msra.mxu0 0.0
        %211 = vmatpush.xpose.msra.mxu0 0.0
        %212 = vmatpush.xpose.msra.mxu0 0.0
        %213 = vmatpush.xpose.msra.mxu0 0.0
        %214 = vmatpush.xpose.msra.mxu0 0.0
        %215 = vmatpush.xpose.msra.mxu0 0.0
        %216 = vmatpush.xpose.msra.mxu0 0.0
        %217 = vmatpush.xpose.msra.mxu0 0.0
        %218 = vmatpush.xpose.msra.mxu0 0.0
        %219 = vmatpush.xpose.msra.mxu0 0.0
        %220 = vmatpush.xpose.msra.mxu0 0.0
        %221 = vmatpush.xpose.msra.mxu0 %v201
        %222 = vmatpush.xpose.msra.mxu0 %v197
        %223 = vmatmul.f32.gmra.mxu0 %v197
        %v224 = vpop.f32.mrf.mxu0
        %v225 = vadd.f32 0.0, %v224
        %226 = vmatmul.f32.gmra.mxu0 %v201
        %v227 = vpop.f32.mrf.mxu0
        %v228 = vadd.f32 0.0, %v227
        %229 = vdwg.mxu0
        %230 = vmatpush.xpose.msra.mxu0 0.0
        %231 = vmatpush.xpose.msra.mxu0 0.0
        %232 = vmatpush.xpose.msra.mxu0 0.0
        %233 = vmatpush.xpose.msra.mxu0 0.0
        %234 = vmatpush.xpose.msra.mxu0 0.0
        %235 = vmatpush.xpose.msra.mxu0 0.0
        %236 = vmatpush.xpose.msra.mxu0 0.0
        %237 = vmatpush.xpose.msra.mxu0 0.0
        %238 = vmatpush.xpose.msra.mxu0 0.0
        %239 = vmatpush.xpose.msra.mxu0 0.0
        %240 = vmatpush.xpose.msra.mxu0 0.0
        %241 = vmatpush.xpose.msra.mxu0 0.0
        %242 = vmatpush.xpose.msra.mxu0 0.0
        %243 = vmatpush.xpose.msra.mxu0 0.0
        %244 = vmatpush.xpose.msra.mxu0 %v202
        %245 = vmatpush.xpose.msra.mxu0 %v198
        %246 = vmatmul.f32.gmra.mxu0 %v198
        %v247 = vpop.f32.mrf.mxu0
        %v248 = vadd.f32 %v225, %v247
        %249 = vmatmul.f32.gmra.mxu0 %v202
        %v250 = vpop.f32.mrf.mxu0
        %v251 = vadd.f32 %v228, %v250
        %252 = vdwg.mxu0
        %253 = vmatpush.xpose.msra.mxu0 0.0
        %254 = vmatpush.xpose.msra.mxu0 0.0
        %255 = vmatpush.xpose.msra.mxu0 0.0
        %256 = vmatpush.xpose.msra.mxu0 0.0
        %257 = vmatpush.xpose.msra.mxu0 0.0
        %258 = vmatpush.xpose.msra.mxu0 0.0
        %259 = vmatpush.xpose.msra.mxu0 0.0
        %260 = vmatpush.xpose.msra.mxu0 0.0
        %261 = vmatpush.xpose.msra.mxu0 0.0
        %262 = vmatpush.xpose.msra.mxu0 0.0
        %263 = vmatpush.xpose.msra.mxu0 0.0
        %264 = vmatpush.xpose.msra.mxu0 0.0
        %265 = vmatpush.xpose.msra.mxu0 0.0
        %266 = vmatpush.xpose.msra.mxu0 0.0
        %267 = vmatpush.xpose.msra.mxu0 %v203
        %268 = vmatpush.xpose.msra.mxu0 %v199
        %269 = vmatmul.f32.gmra.mxu0 %v199
        %v270 = vpop.f32.mrf.mxu0
        %v271 = vadd.f32 %v248, %v270
        %272 = vmatmul.f32.gmra.mxu0 %v203
        %v273 = vpop.f32.mrf.mxu0
        %v274 = vadd.f32 %v251, %v273
        %275 = vdwg.mxu0
        %276 = vmatpush.xpose.msra.mxu0 0.0
        %277 = vmatpush.xpose.msra.mxu0 0.0
        %278 = vmatpush.xpose.msra.mxu0 0.0
        %279 = vmatpush.xpose.msra.mxu0 0.0
        %280 = vmatpush.xpose.msra.mxu0 0.0
        %281 = vmatpush.xpose.msra.mxu0 0.0
        %282 = vmatpush.xpose.msra.mxu0 0.0
        %283 = vmatpush.xpose.msra.mxu0 0.0
        %284 = vmatpush.xpose.msra.mxu0 0.0
        %285 = vmatpush.xpose.msra.mxu0 0.0
        %286 = vmatpush.xpose.msra.mxu0 0.0
        %287 = vmatpush.xpose.msra.mxu0 0.0
        %288 = vmatpush.xpose.msra.mxu0 0.0
        %289 = vmatpush.xpose.msra.mxu0 0.0
        %290 = vmatpush.xpose.msra.mxu0 %v204
        %291 = vmatpush.xpose.msra.mxu0 %v200
        %292 = vmatmul.f32.gmra.mxu0 %v200
        %v293 = vpop.f32.mrf.mxu0
        %v294 = vadd.f32 %v271, %v293
        %295 = vmatmul.f32.gmra.mxu0 %v204
        %v296 = vpop.f32.mrf.mxu0
        %v297 = vadd.f32 %v274, %v296
        %298 = vdwg.mxu0
        %v299 = vadd.f32 %v205, %v294
        %v300 = vadd.f32 %v206, %v297
        %vm301 = vcmask 97280
        %302 = vst.msk [vmem:[%s188] sm:$0xff] %vm301, %v299
        %vm303 = vcmask 93184
        %304 = vst.msk [vmem:[%s188 + $0x8] sm:$0xf] %vm303, %v300
        %p305 = scmp.lt.s32.totalorder %s17, 1
        %s306 = scalar_select %p305, %s17, 1
        %p307 = scmp.lt.s32.totalorder %s18, 0
        %s308 = scalar_select %p307, %s18, 0
        %s309 = smul.addr %s308, 2
        %s310 = smul.addr %s306, 2
        %s311 = sadd.s32 %s309, %s310
        %s312 = smul.addr %s311, 8
        %s313 = scalar_lea.vmem %s1, %s312
        // Predicated region
        $region52: #{tpu_custom_call.1} parent=42 // pred_check
          %p314 = pneg %p81
        $region53: #{tpu_custom_call.1} parent=42 // pred_check_branch
          %316 = sbr.rel (%p314) target = $region55
        $region54: #{tpu_custom_call.1} parent=42 // pred_region
          _
        $region55: #{tpu_custom_call.1} parent=42 // pred_fallthru
          _
      $region43: #{tpu_custom_call.1} parent=5 // pred_fallthru
        _
      %p317 = scmp.le.s32.totalorder 2, %s7
      // Predicated region
      $region56: #{tpu_custom_call.1} parent=5 // pred_check
        %p318 = pneg %p317
      $region57: #{tpu_custom_call.1} parent=5 // pred_check_branch
        %320 = sbr.rel (%p318) target = $region59
      $region58: #{tpu_custom_call.1} parent=5 // pred_region
        %s321 = ssub.s32 %s7, 2
        // Predicated region
        $region60: #{tpu_custom_call.1} parent=58 // pred_check
          %p322 = pneg %p87
        $region61: #{tpu_custom_call.1} parent=58 // pred_check_branch
          %324 = sbr.rel (%p322) target = $region63
        $region62: #{tpu_custom_call.1} parent=58 // pred_region
          %p325 = scmp.lt.s32.totalorder %s20, 1
          %s326 = scalar_select %p325, %s20, 1
          %p327 = scmp.lt.s32.totalorder %s21, 0
          %s328 = scalar_select %p327, %s21, 0
          %s329 = smul.addr %s328, 2
          %s330 = smul.addr %s326, 2
          %s331 = sadd.s32 %s329, %s330
          %s332 = smul.addr %s331, 8
          %s333 = scalar_lea.vmem %s1, %s332
        $region63: #{tpu_custom_call.1} parent=58 // pred_fallthru
          _
      $region59: #{tpu_custom_call.1} parent=5 // pred_fallthru
        _
    $region6: #{tpu_custom_call.1} parent=1 // loop_footer
      %s11 = sadd.s32 1, %s7
    $region7: #{tpu_custom_call.1} parent=1 // loop_footer_branch
      %6 = sbr.rel target = $region3
    $region8: #{tpu_custom_call.1} parent=1 // loop_exit
      _

</llo_original>
